<compile_context>
chip_gen: v7x
topology: tpu7x:2x2x1
jax: 0.10.0
libtpu: 0.0.40
codegen_flags: <defaults>
</compile_context>

<pallas_src>
import jax
import jax.numpy as jnp
from jax import lax
from jax.experimental import pallas as pl
from jax.experimental.pallas import tpu as pltpu

_LANES = 128
_NUM_CORES = 2  # v7x has 2 TensorCores per chip; harmless (serial) elsewhere.


def _make_dice_kernel(tile_rows, valid_rows, needs_mask):
    sub = tile_rows // 8

    def kernel(p_ref, t_ref, o_ref):
        c = pl.program_id(0)
        i = pl.program_id(1)

        @pl.when(i == 0)
        def _():
            o_ref[...] = jnp.zeros_like(o_ref)

        p = p_ref[...].astype(jnp.float32)
        t = t_ref[...].astype(jnp.float32)

        if needs_mask:
            # Unclamped logical tile index -> global row ids; rows past the
            # valid range (block padding / clamped duplicate tiles) -> 0.
            tile = c * pl.num_programs(1) + i
            row0 = tile * tile_rows
            row_ids = lax.broadcasted_iota(jnp.int32, (tile_rows, _LANES), 0) + row0
            mask = row_ids < valid_rows
            p = jnp.where(mask, p, 0.0)
            t = jnp.where(mask, t, 0.0)

        prod = (p * t).reshape(sub, 8, _LANES)
        ssum = (p + t).reshape(sub, 8, _LANES)
        # Vector accumulation into the resident output block (VPU only);
        # cross-lane reduce is deferred to the wrapper epilogue.
        o_ref[0, 0] += jnp.sum(prod, axis=0)
        o_ref[0, 1] += jnp.sum(ssum, axis=0)

    return kernel


def dice_loss(pred, target, eps=1e-6, tile_rows=1024):
    """Pallas TPU implementation of DiceLoss.forward(pred, target)."""
    assert pred.shape == target.shape
    total = pred.size
    assert total > 0

    p_flat = pred.reshape(-1)
    t_flat = target.reshape(-1)
    pad = (-total) % _LANES
    if pad:
        # TODO(synk): rare path (element count not a multiple of 128); the
        # tiny zero pad is neutral for both reductions.
        p_flat = jnp.pad(p_flat, (0, pad))
        t_flat = jnp.pad(t_flat, (0, pad))

    rows = (total + pad) // _LANES
    p2 = p_flat.reshape(rows, _LANES)
    t2 = t_flat.reshape(rows, _LANES)

    # Block rows: multiple of 8 sublanes, no larger than needed.
    tile_rows = max(8, min(tile_rows, (rows // 8) * 8))
    num_tiles = pl.cdiv(rows, tile_rows)
    tiles_per_core = pl.cdiv(num_tiles, _NUM_CORES)
    needs_mask = (_NUM_CORES * tiles_per_core * tile_rows) != rows

    def in_index(c, i):
        # Clamp fully-out-of-range logical tiles onto the last real tile;
        # the in-kernel row mask zeroes their (duplicate) contribution.
        tile = jnp.minimum(c * tiles_per_core + i, num_tiles - 1)
        return (tile, 0)

    bytes_in = p2.size * p2.dtype.itemsize + t2.size * t2.dtype.itemsize
    cost = pl.CostEstimate(
        flops=5 * total,
        transcendentals=0,
        bytes_accessed=bytes_in + _NUM_CORES * 2 * 8 * _LANES * 4,
    )

    partials = pl.pallas_call(
        _make_dice_kernel(tile_rows, rows, needs_mask),
        out_shape=jax.ShapeDtypeStruct((_NUM_CORES, 2, 8, _LANES), jnp.float32),
        grid_spec=pltpu.PrefetchScalarGridSpec(
            num_scalar_prefetch=0,
            grid=(_NUM_CORES, tiles_per_core),
            in_specs=[
                pl.BlockSpec((tile_rows, _LANES), in_index),
                pl.BlockSpec((tile_rows, _LANES), in_index),
            ],
            out_specs=pl.BlockSpec((1, 2, 8, _LANES), lambda c, i: (c, 0, 0, 0)),
        ),
        compiler_params=pltpu.CompilerParams(
            dimension_semantics=("parallel", "arbitrary"),
        ),
        cost_estimate=cost,
    )(p2, t2)

    numerator = 2.0 * jnp.sum(partials[:, 0])
    denominator = jnp.sum(partials[:, 1])
    dice_score = numerator / (denominator + jnp.float32(eps))
    return jnp.float32(1.0) - dice_score


if __name__ == "__main__":
    key = jax.random.PRNGKey(0)
    k1, k2 = jax.random.split(key)
    # Typical segmentation shapes: NCHW
    pred = jax.nn.sigmoid(jax.random.normal(k1, (2, 4, 16, 16), jnp.float32))
    target = (jax.random.uniform(k2, (2, 4, 16, 16)) > 0.5).astype(jnp.float32)

    loss = jax.block_until_ready(dice_loss(pred, target))

    # Reference (plain JAX), mirrors the PyTorch forward exactly.
    num = 2.0 * jnp.sum(pred * target)
    den = jnp.sum(pred + target)
    ref = 1.0 - num / (den + 1e-6)

    assert jnp.allclose(loss, ref, atol=1e-5, rtol=1e-5), (loss, ref)
    print("KERNEL_OK")
</pallas_src>

<mosaic_0001>
module attributes {stable_mosaic.version = 11 : i64} {
  func.func @kernel(%arg0: i32, %arg1: i32, %arg2: memref<16x128xf32, #tpu.memory_space<vmem>>, %arg3: memref<16x128xf32, #tpu.memory_space<vmem>>, %arg4: memref<1x2x8x128xf32, #tpu.memory_space<vmem>>) attributes {dimension_semantics = [#tpu.dimension_semantics<parallel>, #tpu.dimension_semantics<arbitrary>], iteration_bounds = array<i64: 2, 1>, scalar_prefetch = 0 : i64, scratch_operands = 0 : i64, tpu.core_type = #tpu.core_type<tc>, window_params = [{transform_indices = @transform_0, window_bounds = array<i64: 16, 128>}, {transform_indices = @transform_1, window_bounds = array<i64: 16, 128>}, {transform_indices = @transform_2, window_bounds = array<i64: 1, 2, 8, 128>}]} {
    %c0_i32 = arith.constant 0 : i32
    %0 = arith.cmpi eq, %arg1, %c0_i32 : i32
    %1 = arith.extui %0 : i1 to i32
    %c0_i32_0 = arith.constant 0 : i32
    %2 = arith.cmpi ne, %1, %c0_i32_0 : i32
    scf.if %2 {
      %cst_23 = arith.constant 0.000000e+00 : f32
      %35 = vector.broadcast %cst_23 : f32 to vector<1x2x8x128xf32>
      %c0_24 = arith.constant 0 : index
      %c0_25 = arith.constant 0 : index
      %c0_26 = arith.constant 0 : index
      %c0_27 = arith.constant 0 : index
      %36 = vector.load %arg4[%c0_24, %c0_25, %c0_26, %c0_27] : memref<1x2x8x128xf32, #tpu.memory_space<vmem>>, vector<1x2x8x128xf32>
      tpu.vector_store %arg4[%c0_24, %c0_25, %c0_26, %c0_27], %35 {strides = array<i32>} : memref<1x2x8x128xf32, #tpu.memory_space<vmem>>, vector<1x2x8x128xf32>,
    } else {
    }
    %c0 = arith.constant 0 : index
    %c0_1 = arith.constant 0 : index
    %3 = vector.load %arg2[%c0, %c0_1] : memref<16x128xf32, #tpu.memory_space<vmem>>, vector<16x128xf32>
    %c0_2 = arith.constant 0 : index
    %c0_3 = arith.constant 0 : index
    %4 = vector.load %arg3[%c0_2, %c0_3] : memref<16x128xf32, #tpu.memory_space<vmem>>, vector<16x128xf32>
    %c1_i32 = arith.constant 1 : i32
    %5 = arith.muli %arg0, %c1_i32 : i32
    %6 = arith.addi %5, %arg1 : i32
    %c16_i32 = arith.constant 16 : i32
    %7 = arith.muli %6, %c16_i32 : i32
    %8 = tpu.iota {dimensions = array<i32: 0>} : vector<16x128xi32>
    %9 = vector.broadcast %7 : i32 to vector<16x128xi32>
    %10 = arith.addi %8, %9 : vector<16x128xi32>
    %c16_i32_4 = arith.constant 16 : i32
    %11 = vector.broadcast %c16_i32_4 : i32 to vector<16x128xi32>
    %12 = arith.cmpi slt, %10, %11 : vector<16x128xi32>
    %cst = arith.constant 0.000000e+00 : f32
    %13 = vector.broadcast %cst : f32 to vector<16x128xf32>
    %14 = arith.select %12, %3, %13 : vector<16x128xi1>, vector<16x128xf32>
    %cst_5 = arith.constant 0.000000e+00 : f32
    %15 = vector.broadcast %cst_5 : f32 to vector<16x128xf32>
    %16 = arith.select %12, %4, %15 : vector<16x128xi1>, vector<16x128xf32>
    %17 = arith.mulf %14, %16 : vector<16x128xf32>
    %18 = vector.shape_cast %17 : vector<16x128xf32> to vector<2x8x128xf32>
    %19 = arith.addf %14, %16 : vector<16x128xf32>
    %20 = vector.shape_cast %19 : vector<16x128xf32> to vector<2x8x128xf32>
    %c0_6 = arith.constant 0 : index
    %c0_7 = arith.constant 0 : index
    %c0_8 = arith.constant 0 : index
    %c0_9 = arith.constant 0 : index
    %21 = vector.load %arg4[%c0_6, %c0_7, %c0_8, %c0_9] : memref<1x2x8x128xf32, #tpu.memory_space<vmem>>, vector<1x1x8x128xf32>
    %22 = vector.shape_cast %21 : vector<1x1x8x128xf32> to vector<8x128xf32>
    %cst_10 = arith.constant dense<0.000000e+00> : vector<8x128xf32>
    %23 = vector.multi_reduction <add>, %18, %cst_10 [0] : vector<2x8x128xf32> to vector<8x128xf32>
    %24 = arith.addf %22, %23 : vector<8x128xf32>
    %c0_11 = arith.constant 0 : index
    %c0_12 = arith.constant 0 : index
    %c0_13 = arith.constant 0 : index
    %c0_14 = arith.constant 0 : index
    %25 = vector.load %arg4[%c0_11, %c0_12, %c0_13, %c0_14] : memref<1x2x8x128xf32, #tpu.memory_space<vmem>>, vector<1x1x8x128xf32>
    %26 = vector.shape_cast %25 : vector<1x1x8x128xf32> to vector<8x128xf32>
    %27 = vector.shape_cast %24 : vector<8x128xf32> to vector<1x1x8x128xf32>
    tpu.vector_store %arg4[%c0_11, %c0_12, %c0_13, %c0_14], %27 {strides = array<i32>} : memref<1x2x8x128xf32, #tpu.memory_space<vmem>>, vector<1x1x8x128xf32>,
    %c0_15 = arith.constant 0 : index
    %c1 = arith.constant 1 : index
    %c0_16 = arith.constant 0 : index
    %c0_17 = arith.constant 0 : index
    %28 = vector.load %arg4[%c0_15, %c1, %c0_16, %c0_17] : memref<1x2x8x128xf32, #tpu.memory_space<vmem>>, vector<1x1x8x128xf32>
    %29 = vector.shape_cast %28 : vector<1x1x8x128xf32> to vector<8x128xf32>
    %cst_18 = arith.constant dense<0.000000e+00> : vector<8x128xf32>
    %30 = vector.multi_reduction <add>, %20, %cst_18 [0] : vector<2x8x128xf32> to vector<8x128xf32>
    %31 = arith.addf %29, %30 : vector<8x128xf32>
    %c0_19 = arith.constant 0 : index
    %c1_20 = arith.constant 1 : index
    %c0_21 = arith.constant 0 : index
    %c0_22 = arith.constant 0 : index
    %32 = vector.load %arg4[%c0_19, %c1_20, %c0_21, %c0_22] : memref<1x2x8x128xf32, #tpu.memory_space<vmem>>, vector<1x1x8x128xf32>
    %33 = vector.shape_cast %32 : vector<1x1x8x128xf32> to vector<8x128xf32>
    %34 = vector.shape_cast %31 : vector<8x128xf32> to vector<1x1x8x128xf32>
    tpu.vector_store %arg4[%c0_19, %c1_20, %c0_21, %c0_22], %34 {strides = array<i32>} : memref<1x2x8x128xf32, #tpu.memory_space<vmem>>, vector<1x1x8x128xf32>,
    return
  }
  func.func @transform_0(%arg0: i32, %arg1: i32) -> (i32, i32) {
    %c1_i32 = arith.constant 1 : i32
    %0 = arith.muli %arg0, %c1_i32 : i32
    %1 = arith.addi %0, %arg1 : i32
    %c0_i32 = arith.constant 0 : i32
    %2 = arith.minsi %1, %c0_i32 : i32
    %c0_i32_0 = arith.constant 0 : i32
    %c0_i32_1 = arith.constant 0 : i32
    return %2, %c0_i32_0 : i32, i32
  }
  func.func @transform_1(%arg0: i32, %arg1: i32) -> (i32, i32) {
    %c1_i32 = arith.constant 1 : i32
    %0 = arith.muli %arg0, %c1_i32 : i32
    %1 = arith.addi %0, %arg1 : i32
    %c0_i32 = arith.constant 0 : i32
    %2 = arith.minsi %1, %c0_i32 : i32
    %c0_i32_0 = arith.constant 0 : i32
    %c0_i32_1 = arith.constant 0 : i32
    return %2, %c0_i32_0 : i32, i32
  }
  func.func @transform_2(%arg0: i32, %arg1: i32) -> (i32, i32, i32, i32) {
    %c0_i32 = arith.constant 0 : i32
    %c0_i32_0 = arith.constant 0 : i32
    %c0_i32_1 = arith.constant 0 : i32
    %c0_i32_2 = arith.constant 0 : i32
    return %arg0, %c0_i32, %c0_i32_0, %c0_i32_1 : i32, i32, i32, i32
  }
}

</mosaic_0001>

<llo_original>
// kernel: tpu_custom_call.1
$region0: #{tpu_custom_call.1}
  #allocation0 [shape = 'u32[]', space=smem, size = 0x4, offset = 0x4, fixed_abs, tag = 'smem constant byte address 0x4 - core index']
  #allocation1 [shape = 'u32[144,128]{1,0:T(1,128)}', space=vmem, size = 0x12000, scoped, tag = 'internal scratch']
  %s0 = inlined_call_operand.hbm [shape: f32[16,128], index: 0, kind: input, shape index: {}]
  %s1 = inlined_call_operand.hbm [shape: f32[16,128], index: 1, kind: input, shape index: {}]
  %s2 = inlined_call_operand.hbm [shape: f32[2,2,8,128], index: 2, kind: output, shape index: {}]
  %s3 = sld [smem:[#allocation0]]
  $region53: #{tpu_custom_call.1} parent=0
    _
  %s5 = ssub.s32 1, %s3
  %s6 = scalar_select 0, %s5, %s3
  $region1: #{tpu_custom_call.1} parent=0
    #allocation2 [shape = 'u8[16384]{0}', space=vmem, size = 0x4000, scoped, tag = 'input window, operand 0']
    #allocation3 [shape = 's32[2]{0}', space=sflag, size = 0x8, scoped, tag = 'scoped memory for tpu_custom_call.1']
    #allocation4 [shape = 's32[2]{0}', space=sflag, size = 0x8, scoped, tag = 'scoped memory for tpu_custom_call.1']
    #allocation5 [shape = 'u8[16384]{0}', space=vmem, size = 0x4000, scoped, tag = 'input window, operand 1']
    #allocation6 [shape = 's32[2]{0}', space=sflag, size = 0x8, scoped, tag = 'scoped memory for tpu_custom_call.1']
    #allocation7 [shape = 'u8[16384]{0}', space=vmem, size = 0x4000, scoped, tag = 'output window, operand 0']
    %7 = vsyncpa [#allocation3], 0
    %s8 = scalar_lea.sflag [#allocation3], 1
    %9 = vsyncpa %s8, 0
    %10 = vsyncpa [#allocation6], 0
    %s11 = scalar_lea.sflag [#allocation6], 1
    %12 = vsyncpa %s11, 0
    %13 = vsyncpa [#allocation4], 0
    %s14 = scalar_lea.sflag [#allocation4], 1
    %15 = vsyncpa %s14, 0
    loop: start=0, step=1, limit=4
    $region2: #{tpu_custom_call.1} parent=1 // loop_pre_header
      _
    $region3: #{tpu_custom_call.1} parent=1 // loop_header
      %s17 = sphi 0, %s21
      %p18 = scmp.ge.s32.totalorder %s17, 4
      %s24 = sphi 0, %s36
      %s25 = sphi 0, %s32
      %s26 = sphi 0, %s24
      %s27 = sphi 0, %s25
      %s28 = sphi 0, %s26
      %s29 = sphi 0, %s27
      %s45 = sphi 0, %s47
      %s48 = sphi 0, %s45
      %s49 = sphi 0, %s48
      %s65 = sphi 0, %s49
      %s77 = sphi 0, %s79
      %s80 = sphi 0, %s77
      %s81 = sphi 0, %s80
      %s97 = sphi 0, %s81
      %s103 = sphi 0, %s105
      %s106 = sphi 0, %s103
      %s107 = sphi 0, %s106
      %s123 = sphi 0, %s107
    $region4: #{tpu_custom_call.1} parent=1 // loop_header_branch
      %20 = sbr.rel (%p18) target = $region8
    $region5: #{tpu_custom_call.1} parent=1 // loop_body
      %s22 = ssub.s32 %s17, 1
      %s23 = ssub.s32 %s17, 2
      %s30 = sadd.s32 1, %s25
      %p31 = scmp.ge.s32.totalorder %s30, 1
      %s32 = scalar_select %p31, 0, %s30
      %s33 = sadd.s32 1, %s24
      %s34 = scalar_select %p31, %s33, %s24
      %p35 = scmp.ge.s32.totalorder %s34, 2
      %s36 = scalar_select %p35, 0, %s34
      %s37 = sadd.s32 %s24, %s25
      %p38 = scmp.lt.s32.totalorder %s37, 0
      %s39 = scalar_select %p38, %s37, 0
      %s40 = sadd.s32 %s36, %s32
      %p41 = scmp.lt.s32.totalorder %s40, 0
      %s42 = scalar_select %p41, %s40, 0
      %s43 = ssub.s32 %s39, %s42
      %p44 = scmp.eq.s32.totalorder %s43, 0
      %s46 = sadd.s32 %s45, 1
      %s47 = scalar_select %p44, %s45, %s46
      %p50 = pneg %p44
      %p51 = scmp.eq.s32.totalorder %s17, 1
      %p52 = por %p50, %p51
      %p53 = scmp.ne.s32.totalorder %s45, %s48
      %p54 = scmp.eq.s32.totalorder %s17, 0
      %p55 = por %p53, %p54
      %p56 = scmp.ne.s32.totalorder %s45, %s48
      %p57 = scmp.eq.s32.totalorder %s22, 1
      %p58 = por %p56, %p57
      %p59 = scmp.ne.s32.totalorder %s48, %s49
      %p60 = scmp.eq.s32.totalorder %s22, 0
      %p61 = por %p59, %p60
      %p62 = scmp.ne.s32.totalorder %s48, %s49
      %p63 = scmp.eq.s32.totalorder %s23, 1
      %p64 = por %p62, %p63
      %p66 = scmp.ne.s32.totalorder %s49, %s65
      %p67 = scmp.eq.s32.totalorder %s23, 0
      %p68 = por %p66, %p67
      %s69 = sadd.s32 %s24, %s25
      %p70 = scmp.lt.s32.totalorder %s69, 0
      %s71 = scalar_select %p70, %s69, 0
      %s72 = sadd.s32 %s36, %s32
      %p73 = scmp.lt.s32.totalorder %s72, 0
      %s74 = scalar_select %p73, %s72, 0
      %s75 = ssub.s32 %s71, %s74
      %p76 = scmp.eq.s32.totalorder %s75, 0
      %s78 = sadd.s32 %s77, 1
      %s79 = scalar_select %p76, %s77, %s78
      %p82 = pneg %p76
      %p83 = scmp.eq.s32.totalorder %s17, 1
      %p84 = por %p82, %p83
      %p85 = scmp.ne.s32.totalorder %s77, %s80
      %p86 = scmp.eq.s32.totalorder %s17, 0
      %p87 = por %p85, %p86
      %p88 = scmp.ne.s32.totalorder %s77, %s80
      %p89 = scmp.eq.s32.totalorder %s22, 1
      %p90 = por %p88, %p89
      %p91 = scmp.ne.s32.totalorder %s80, %s81
      %p92 = scmp.eq.s32.totalorder %s22, 0
      %p93 = por %p91, %p92
      %p94 = scmp.ne.s32.totalorder %s80, %s81
      %p95 = scmp.eq.s32.totalorder %s23, 1
      %p96 = por %p94, %p95
      %p98 = scmp.ne.s32.totalorder %s81, %s97
      %p99 = scmp.eq.s32.totalorder %s23, 0
      %p100 = por %p98, %p99
      %s101 = ssub.s32 %s24, %s36
      %p102 = scmp.eq.s32.totalorder %s101, 0
      %s104 = sadd.s32 %s103, 1
      %s105 = scalar_select %p102, %s103, %s104
      %p108 = pneg %p102
      %p109 = scmp.eq.s32.totalorder %s17, 1
      %p110 = por %p108, %p109
      %p111 = scmp.ne.s32.totalorder %s103, %s106
      %p112 = scmp.eq.s32.totalorder %s17, 0
      %p113 = por %p111, %p112
      %p114 = scmp.ne.s32.totalorder %s103, %s106
      %p115 = scmp.eq.s32.totalorder %s22, 1
      %p116 = por %p114, %p115
      %p117 = scmp.ne.s32.totalorder %s106, %s107
      %p118 = scmp.eq.s32.totalorder %s22, 0
      %p119 = por %p117, %p118
      %p120 = scmp.ne.s32.totalorder %s106, %s107
      %p121 = scmp.eq.s32.totalorder %s23, 1
      %p122 = por %p120, %p121
      %p124 = scmp.ne.s32.totalorder %s107, %s123
      %p125 = scmp.eq.s32.totalorder %s23, 0
      %p126 = por %p124, %p125
      %p127 = scmp.le.s32.totalorder 1, %s17
      %p128 = scmp.lt.s32.totalorder %s17, 3
      %p129 = pnand %p127, %p128
      %p130 = pneg %p129
      // Predicated region
      $region9: #{tpu_custom_call.1} parent=5 // pred_check
        _
      $region10: #{tpu_custom_call.1} parent=5 // pred_check_branch
        %132 = sbr.rel (%p129) target = $region12
      $region11: #{tpu_custom_call.1} parent=5 // pred_region
        %s133 = ssub.s32 %s17, 1
      $region12: #{tpu_custom_call.1} parent=5 // pred_fallthru
        _
      %p134 = scmp.lt.s32.totalorder %s17, 2
      // Predicated region
      $region13: #{tpu_custom_call.1} parent=5 // pred_check
        %p135 = pneg %p134
      $region14: #{tpu_custom_call.1} parent=5 // pred_check_branch
        %137 = sbr.rel (%p135) target = $region16
      $region15: #{tpu_custom_call.1} parent=5 // pred_region
        // Predicated region
        $region17: #{tpu_custom_call.1} parent=15 // pred_check
          %p138 = pneg %p55
        $region18: #{tpu_custom_call.1} parent=15 // pred_check_branch
          %140 = sbr.rel (%p138) target = $region20
        $region19: #{tpu_custom_call.1} parent=15 // pred_region
          %s141 = sand.u32 %s45, 1
          %s142 = scalar_lea.sflag [#allocation3], %s141
          %s143 = sand.u32 %s45, 1
          %s144 = smul.addr %s143, 16
          %s145 = scalar_lea.vmem [#allocation2], %s144
          %s146 = sadd.s32 %s24, %s25
          %p147 = scmp.lt.s32.totalorder %s146, 0
          %s148 = scalar_select %p147, %s146, 0
          %s149 = smul.u32 2, %s148
          %s151 = ssub.s32 256, 256
          %152 = vsyncadd %s142, %s151
          %s153 = smul.addr %s149, 128
          %s154 = scalar_lea.hbm %s0, %s153
          %s155 = sshll.u32 %s145, 4
          %s156 = int_to_ptr.vmem [resolvable:$true] %s155
          %161 = dma.hbm_to_vmem [thread:$0]  %s154, 256, %s156, %s142, 128, 128, 8
        $region20: #{tpu_custom_call.1} parent=15 // pred_fallthru
          _
        // Predicated region
        $region21: #{tpu_custom_call.1} parent=15 // pred_check
          %p162 = pneg %p87
        $region22: #{tpu_custom_call.1} parent=15 // pred_check_branch
          %164 = sbr.rel (%p162) target = $region24
        $region23: #{tpu_custom_call.1} parent=15 // pred_region
          %s165 = sand.u32 %s77, 1
          %s166 = scalar_lea.sflag [#allocation6], %s165
          %s167 = sand.u32 %s77, 1
          %s168 = smul.addr %s167, 16
          %s169 = scalar_lea.vmem [#allocation5], %s168
          %s170 = sadd.s32 %s24, %s25
          %p171 = scmp.lt.s32.totalorder %s170, 0
          %s172 = scalar_select %p171, %s170, 0
          %s173 = smul.u32 2, %s172
          %s175 = ssub.s32 256, 256
          %176 = vsyncadd %s166, %s175
          %s177 = smul.addr %s173, 128
          %s178 = scalar_lea.hbm %s1, %s177
          %s179 = sshll.u32 %s169, 4
          %s180 = int_to_ptr.vmem [resolvable:$true] %s179
          %185 = dma.hbm_to_vmem [thread:$0]  %s178, 256, %s180, %s166, 128, 128, 8
        $region24: #{tpu_custom_call.1} parent=15 // pred_fallthru
          _
      $region16: #{tpu_custom_call.1} parent=5 // pred_fallthru
        _
      %p186 = scmp.le.s32.totalorder 1, %s17
      %p187 = scmp.lt.s32.totalorder %s17, 3
      %p188 = pnand %p186, %p187
      %p189 = pneg %p188
      // Predicated region
      $region25: #{tpu_custom_call.1} parent=5 // pred_check
        _
      $region26: #{tpu_custom_call.1} parent=5 // pred_check_branch
        %191 = sbr.rel (%p188) target = $region28
      $region27: #{tpu_custom_call.1} parent=5 // pred_region
        %s192 = ssub.s32 %s17, 1
        %s193 = sand.u32 %s48, 1
        %s194 = scalar_lea.sflag [#allocation3], %s193
        %s195 = sand.u32 %s48, 1
        %s196 = smul.addr %s195, 16
        %s197 = scalar_lea.vmem [#allocation2], %s196
        // Predicated region
        $region29: #{tpu_custom_call.1} parent=27 // pred_check
          %p198 = pneg %p61
        $region30: #{tpu_custom_call.1} parent=27 // pred_check_branch
          %200 = sbr.rel (%p198) target = $region32
        $region31: #{tpu_custom_call.1} parent=27 // pred_region
          %201 = dma.done %s194, 256
        $region32: #{tpu_custom_call.1} parent=27 // pred_fallthru
          _
        %s202 = sand.u32 %s80, 1
        %s203 = scalar_lea.sflag [#allocation6], %s202
        %s204 = sand.u32 %s80, 1
        %s205 = smul.addr %s204, 16
        %s206 = scalar_lea.vmem [#allocation5], %s205
        // Predicated region
        $region33: #{tpu_custom_call.1} parent=27 // pred_check
          %p207 = pneg %p93
        $region34: #{tpu_custom_call.1} parent=27 // pred_check_branch
          %209 = sbr.rel (%p207) target = $region36
        $region35: #{tpu_custom_call.1} parent=27 // pred_region
          %210 = dma.done %s203, 256
        $region36: #{tpu_custom_call.1} parent=27 // pred_fallthru
          _
        %s211 = sand.u32 %s48, 1
        %s212 = scalar_lea.sflag [#allocation3], %s211
        %s213 = sand.u32 %s48, 1
        %s214 = smul.addr %s213, 16
        %s215 = scalar_lea.vmem [#allocation2], %s214
        %p216 = pneg %p61
        %p217 = pneg %p58
        %s218 = sand.u32 %s80, 1
        %s219 = scalar_lea.sflag [#allocation6], %s218
        %s220 = sand.u32 %s80, 1
        %s221 = smul.addr %s220, 16
        %s222 = scalar_lea.vmem [#allocation5], %s221
        %p223 = pneg %p93
        %p224 = pneg %p90
        %p225 = pneg %p119
        %p226 = pneg %p116
        %s227 = sand.u32 %s106, 1
        %s228 = scalar_lea.sflag [#allocation4], %s227
        %s229 = sand.u32 %s106, 1
        %s230 = smul.addr %s229, 16
        %s231 = scalar_lea.vmem [#allocation7], %s230
        %s232 = sadd.s32 %s26, %s27
        %p233 = scmp.lt.s32.totalorder %s232, 0
        %s234 = scalar_select %p233, %s232, 0
        %s235 = smul.u32 2, %s234
        %s236 = sadd.s32 %s26, %s27
        %p237 = scmp.lt.s32.totalorder %s236, 0
        %s238 = scalar_select %p237, %s236, 0
        %s239 = smul.u32 2, %s238
        %p240 = scmp.eq.s32.totalorder %s27, 0
        // Predicated region
        $region37: #{tpu_custom_call.1} parent=27 // pred_check
          %p241 = pneg %p240
        $region38: #{tpu_custom_call.1} parent=27 // pred_check_branch
          %243 = sbr.rel (%p241) target = $region40
        $region39: #{tpu_custom_call.1} parent=27 // pred_region
          %244 = vst [vmem:[%s231] sm:$0xff] 0.0
          %245 = vst [vmem:[%s231 + $0x8] sm:$0xff] 0.0
        $region40: #{tpu_custom_call.1} parent=27 // pred_fallthru
          _
        %v246 = vld [vmem:[%s197] sm:$0xff]
        %v247 = vld [vmem:[%s197 + $0x8] sm:$0xff]
        %v248 = vld [vmem:[%s206] sm:$0xff]
        %v249 = vld [vmem:[%s206 + $0x8] sm:$0xff]
        %s250 = sadd.s32 %s26, %s27
        %s251 = smul.u32 %s250, 16
        %v252 = vlaneseq
        %v253 = vshrl.u32 %v252, 7
        %v254 = vadd.s32 %v253, 8
        %v255 = vstv %s251
        %v256 = vadd.s32 %v253, %v255
        %v257 = vadd.s32 %v254, %v255
        %vm258 = vcmp.lt.s32.totalorder %v256, 16
        %vm259 = vcmp.lt.s32.totalorder %v257, 16
        %v260 = vsel %vm258, %v246, 0.0
        %v261 = vsel %vm259, %v247, 0.0
        %v262 = vsel %vm258, %v248, 0.0
        %v263 = vsel %vm259, %v249, 0.0
        %v264 = vmul.f32 %v260, %v262
        %v265 = vmul.f32 %v261, %v263
        %v266 = vadd.f32 %v260, %v262
        %v267 = vadd.f32 %v261, %v263
        %v268 = vld [vmem:[%s231] sm:$0xff]
        %v269 = vadd.f32 %v264, %v265
        %v270 = vadd.f32 %v268, %v269
        %271 = vst [vmem:[%s231] sm:$0xff] %v270
        %s272 = scalar_lea.vmem %s231, 8 [#allocation7]
        %v273 = vld [vmem:[%s272] sm:$0xff]
        %v274 = vadd.f32 %v266, %v267
        %v275 = vadd.f32 %v273, %v274
        %276 = vst [vmem:[%s272] sm:$0xff] %v275
        %s277 = sand.u32 %s106, 1
        %s278 = scalar_lea.sflag [#allocation4], %s277
        %s279 = sand.u32 %s106, 1
        %s280 = smul.addr %s279, 16
        %s281 = scalar_lea.vmem [#allocation7], %s280
        // Predicated region
        $region41: #{tpu_custom_call.1} parent=27 // pred_check
          %p282 = pneg %p116
        $region42: #{tpu_custom_call.1} parent=27 // pred_check_branch
          %284 = sbr.rel (%p282) target = $region44
        $region43: #{tpu_custom_call.1} parent=27 // pred_region
          %s286 = ssub.s32 256, 256
          %287 = vsyncadd %s278, %s286
          %s288 = smul.addr %s26, 2
          %s289 = smul.addr %s288, 128
          %s290 = scalar_lea.hbm %s2, %s289
          %s291 = sshll.u32 %s281, 4
          %s292 = int_to_ptr.vmem [resolvable:$true] %s291
          %297 = dma.vmem_to_hbm [thread:$0]  %s292, 256, %s290, %s278, 128, 128, 8
        $region44: #{tpu_custom_call.1} parent=27 // pred_fallthru
          _
      $region28: #{tpu_custom_call.1} parent=5 // pred_fallthru
        _
      %p298 = scmp.le.s32.totalorder 2, %s17
      // Predicated region
      $region45: #{tpu_custom_call.1} parent=5 // pred_check
        %p299 = pneg %p298
      $region46: #{tpu_custom_call.1} parent=5 // pred_check_branch
        %301 = sbr.rel (%p299) target = $region48
      $region47: #{tpu_custom_call.1} parent=5 // pred_region
        %s302 = ssub.s32 %s17, 2
        // Predicated region
        $region49: #{tpu_custom_call.1} parent=47 // pred_check
          %p303 = pneg %p122
        $region50: #{tpu_custom_call.1} parent=47 // pred_check_branch
          %305 = sbr.rel (%p303) target = $region52
        $region51: #{tpu_custom_call.1} parent=47 // pred_region
          %s306 = sand.u32 %s107, 1
          %s307 = scalar_lea.sflag [#allocation4], %s306
          %s308 = sand.u32 %s107, 1
          %s309 = smul.addr %s308, 16
          %s310 = scalar_lea.vmem [#allocation7], %s309
          %311 = dma.done %s307, 256
        $region52: #{tpu_custom_call.1} parent=47 // pred_fallthru
          _
      $region48: #{tpu_custom_call.1} parent=5 // pred_fallthru
        _
    $region6: #{tpu_custom_call.1} parent=1 // loop_footer
      %s21 = sadd.s32 1, %s17
    $region7: #{tpu_custom_call.1} parent=1 // loop_footer_branch
      %16 = sbr.rel target = $region3
    $region8: #{tpu_custom_call.1} parent=1 // loop_exit
      _
    %312 = vsyncpa [#allocation3], 1
    %s313 = scalar_lea.sflag [#allocation3], 1
    %314 = vsyncpa %s313, 1
    %315 = vsyncpa [#allocation6], 1
    %s316 = scalar_lea.sflag [#allocation6], 1
    %317 = vsyncpa %s316, 1
    %318 = vsyncpa [#allocation4], 1
    %s319 = scalar_lea.sflag [#allocation4], 1
    %320 = vsyncpa %s319, 1

</llo_original>
